<compile_context>
chip_gen: v5e
topology: v5e:2x2
jax: 0.10.0
libtpu: 0.0.40
codegen_flags: <defaults>
</compile_context>

<pallas_src>
import functools

import jax
import jax.numpy as jnp
from jax.experimental import pallas as pl
from jax.experimental.pallas import tpu as pltpu


def _focal_loss_kernel(x_ref, t_ref, w_ref, o_ref, acc_ref, *,
                       gamma, inv_total, batch, n_steps, boundary_tile,
                       need_mask, approx_sigmoid):
    j = pl.program_id(1)

    @pl.when(j == 0)
    def _():
        acc_ref[...] = jnp.zeros_like(acc_ref)

    x = x_ref[...].astype(jnp.float32)
    t = t_ref[...].astype(jnp.float32)

    # e = exp(-|x|) feeds both the numerically-stable BCE tail and the sigmoid.
    e = jnp.exp(-jnp.abs(x))
    one_pe = 1.0 + e                       # computed once, reused by log() and reciprocal()
    # bce = max(x, 0) - x*t + log(1 + exp(-|x|))  (== F.binary_cross_entropy_with_logits)
    bce = jnp.maximum(x, 0.0) - x * t + jnp.log(one_pe)

    # sigmoid(x) from the same exp: 1/(1+e) for x>=0, e/(1+e) for x<0.
    inv_1pe = pl.reciprocal(one_pe, approx=approx_sigmoid)
    p = jnp.where(x >= 0.0, inv_1pe, e * inv_1pe)

    # (1-p)*t + p*(1-t) == t + p - 2*p*t   (fewer VALU ops per element)
    base = t + p - 2.0 * (p * t)
    # Small integer gamma -> repeated multiply on the VPU instead of pow (log+exp on the EUP).
    if gamma == 0.0:
        fw = jnp.ones_like(base)
    elif float(gamma).is_integer() and 1.0 <= gamma <= 8.0:
        fw = base
        for _ in range(int(gamma) - 1):
            fw = fw * base
    else:
        fw = jnp.power(base, gamma)

    # Per-class weight is applied once in the epilogue (hoisted out of the inner loop).
    loss = fw * bce

    tb = x_ref.shape[0]

    def _fold_rows(v):
        # (tb, C) -> (8, C): elementwise vreg adds only (no cross-lane movement).
        return jnp.sum(v.reshape(tb // 8, 8, v.shape[-1]), axis=0)

    if need_mask:
        tile_idx = pl.program_id(0) * n_steps + j

        @pl.when(tile_idx < boundary_tile)       # full tiles: no masking overhead
        def _():
            acc_ref[...] += _fold_rows(loss)

        @pl.when(tile_idx >= boundary_tile)      # only ragged-boundary / padded tiles pay it
        def _():
            rows = tile_idx * tb + jax.lax.broadcasted_iota(jnp.int32, (tb, 1), 0)
            acc_ref[...] += _fold_rows(jnp.where(rows < batch, loss, 0.0))
    else:
        acc_ref[...] += _fold_rows(loss)

    @pl.when(j == pl.num_programs(1) - 1)
    def _():
        # One small (8, C_pad) weight-multiply + cross-lane reduction per core.
        part = jnp.sum(acc_ref[...] * w_ref[...].astype(jnp.float32)) * inv_total
        # Lane-dense (8,128) output tile per core; wrapper picks one element per core.
        o_ref[...] = jnp.full((8, 128), part, dtype=jnp.float32)


def _round_up(x, m):
    return -(-x // m) * m


def _vmem_budget():
    """(tile_budget_bytes, vmem_limit_bytes), generation-aware with a v7x-safe fallback."""
    try:
        cap = int(pltpu.get_tpu_info().vmem_capacity_bytes)
    except Exception:
        cap = 64 << 20                      # assume the smallest (v7x) if the query fails
    if cap >= (100 << 20):                  # v5e / v6e: 128 MiB physical VMEM
        return 64 << 20, 96 << 20
    return 36 << 20, 48 << 20               # v7x: 64 MiB per TensorCore -> leave headroom


def _pick_tb_cap(c_pad, x_bytes, t_bytes, budget_bytes, max_tile_elems=1 << 20):
    """Largest batch tile (rows) whose double-buffered inputs fit the VMEM budget."""
    fixed = 8 * c_pad * 4 + 2 * c_pad * 4 + 2 * 8 * 128 * 4      # acc + weights + out tiles
    per_row = 2 * (x_bytes + t_bytes) * c_pad                    # double-buffered inputs
    tb = (budget_bytes - fixed) // per_row
    tb = min(tb, max_tile_elems // c_pad, 8192)
    return max(32, int(tb // 32) * 32)


def focal_loss(logits, targets, class_weight=None, gamma=2.0, *,
               tb=None, soft_targets=False, approx_sigmoid=True):
    """Focal loss, mean-reduced over all (batch, class) elements. Forward pass only.

    logits, targets: (B, C); class_weight: (C,) or None. Returns a scalar float32.
    """
    # TODO(synk): forward only -- add a custom_vjp if this loss is differentiated in training.
    B, C = logits.shape
    assert targets.shape == (B, C)
    assert gamma >= 0

    # Pad the class axis to a multiple of 128 lanes (padded weights are 0 -> contribute 0).
    C_pad = max(128, _round_up(C, 128))
    # TODO(synk): tile the class axis too if 32 * C_pad elements alone exceed the VMEM budget.

    if class_weight is None:
        w = jnp.ones((C,), jnp.float32)
    else:
        w = class_weight.astype(jnp.float32).reshape(C)
    if C_pad != C:
        w = jnp.pad(w, (0, C_pad - C))
    w = w.reshape(1, C_pad)

    x = logits                                      # streamed at native dtype, cast in-kernel
    # bf16 targets: exact for hard {0,1} labels, halves the target HBM stream.
    # TODO(synk): pass soft_targets=True to keep full precision for soft / label-smoothed targets.
    t = targets if soft_targets else targets.astype(jnp.bfloat16)

    tile_budget, vmem_limit = _vmem_budget()
    tb_cap = _pick_tb_cap(C_pad, jnp.dtype(x.dtype).itemsize,
                          jnp.dtype(t.dtype).itemsize, tile_budget)

    # Pick the split first, then the tile, so awkward batch sizes are not over-padded.
    if tb is None:
        n_total = 1 if B <= 32 else max(pl.cdiv(B, tb_cap), 2)   # >=2 tiles -> both v7x cores
        tb = min(tb_cap, _round_up(pl.cdiv(B, n_total), 32))
    else:
        assert tb % 32 == 0, "batch tile must be a multiple of 32 rows"
        n_total = max(pl.cdiv(B, tb), 1)

    n_parallel = 2 if n_total >= 2 else 1
    n_steps = pl.cdiv(n_total, n_parallel)
    n_total = n_parallel * n_steps
    B_pad = n_total * tb
    need_mask = B_pad != B
    boundary_tile = B // tb                 # first batch tile that can contain padded rows

    if B_pad != B or C_pad != C:
        x = jnp.pad(x, ((0, B_pad - B), (0, C_pad - C)))
        t = jnp.pad(t, ((0, B_pad - B), (0, C_pad - C)))

    kernel = functools.partial(
        _focal_loss_kernel,
        gamma=float(gamma),
        inv_total=1.0 / float(B * C),
        batch=B,
        n_steps=n_steps,
        boundary_tile=boundary_tile,
        need_mask=need_mask,
        approx_sigmoid=approx_sigmoid,
    )

    out = pl.pallas_call(
        kernel,
        out_shape=jax.ShapeDtypeStruct((n_parallel * 8, 128), jnp.float32),
        grid_spec=pltpu.PrefetchScalarGridSpec(
            num_scalar_prefetch=0,
            grid=(n_parallel, n_steps),
            in_specs=[
                pl.BlockSpec((tb, C_pad), lambda i, j: (i * n_steps + j, 0)),  # logits
                pl.BlockSpec((tb, C_pad), lambda i, j: (i * n_steps + j, 0)),  # targets
                pl.BlockSpec((1, C_pad), lambda i, j: (0, 0)),                 # class weights
            ],
            out_specs=pl.BlockSpec((8, 128), lambda i, j: (i, 0)),   # per-core partial tile
            scratch_shapes=[pltpu.VMEM((8, C_pad), jnp.float32)],    # small per-core accumulator
        ),
        compiler_params=pltpu.CompilerParams(
            dimension_semantics=("parallel", "arbitrary"),
            vmem_limit_bytes=vmem_limit,
        ),
    )(x, t, w)

    # One already-normalized partial per core, broadcast over its (8,128) tile.
    return jnp.sum(out[::8, 0])


if __name__ == "__main__":
    key = jax.random.PRNGKey(0)
    k1, k2, k3 = jax.random.split(key, 3)

    # Small shapes; deliberately NOT multiples of the tile sizes to exercise the
    # batch row-mask and the class-lane padding paths.
    B, C = 30, 96  # (batch_size, num_classes)
    logits = jax.random.normal(k1, (B, C), dtype=jnp.float32)
    targets = (jax.random.uniform(k2, (B, C)) > 0.5).astype(jnp.float32)
    class_weight = 0.5 + jax.random.uniform(k3, (C,), dtype=jnp.float32)

    loss = focal_loss(logits, targets, class_weight, gamma=2.0)
    loss = jax.block_until_ready(loss)

    # Pure-JAX reference (same math as the PyTorch module).
    bce = jnp.maximum(logits, 0.0) - logits * targets + jnp.log1p(jnp.exp(-jnp.abs(logits)))
    p = jax.nn.sigmoid(logits)
    fw = ((1 - p) * targets + p * (1 - targets)) ** 2.0
    ref = jnp.mean(fw * bce * class_weight[None, :])

    # Tolerance accounts for the approximate EUP reciprocal used for the sigmoid.
    assert jnp.allclose(loss, ref, rtol=2e-3, atol=1e-6), (loss, ref)

    print("KERNEL_OK")
</pallas_src>

<mosaic_0001>
module attributes {stable_mosaic.version = 11 : i64} {
  func.func @_focal_loss_kernel(%arg0: i32, %arg1: i32, %arg2: memref<32x128xf32, #tpu.memory_space<vmem>>, %arg3: memref<32x128xbf16, #tpu.memory_space<vmem>>, %arg4: memref<1x128xf32, #tpu.memory_space<vmem>>, %arg5: memref<8x128xf32, #tpu.memory_space<vmem>>, %arg6: memref<8x128xf32, #tpu.memory_space<vmem>>) attributes {dimension_semantics = [#tpu.dimension_semantics<parallel>, #tpu.dimension_semantics<arbitrary>], iteration_bounds = array<i64: 1, 1>, scalar_prefetch = 0 : i64, scratch_operands = 1 : i64, tpu.core_type = #tpu.core_type<tc>, window_params = [{transform_indices = @transform_0, window_bounds = array<i64: 32, 128>}, {transform_indices = @transform_1, window_bounds = array<i64: 32, 128>}, {pipeline_mode = #tpu.pipeline_mode<synchronous>, transform_indices = @transform_2, window_bounds = array<i64: 1, 128>}, {transform_indices = @transform_3, window_bounds = array<i64: 8, 128>}]} {
    %c0_i32 = arith.constant 0 : i32
    %0 = arith.cmpi eq, %arg1, %c0_i32 : i32
    %1 = arith.extui %0 : i1 to i32
    %c0_i32_0 = arith.constant 0 : i32
    %2 = arith.cmpi ne, %1, %c0_i32_0 : i32
    scf.if %2 {
      %cst_14 = arith.constant 0.000000e+00 : f32
      %41 = vector.broadcast %cst_14 : f32 to vector<8x128xf32>
      %c0_15 = arith.constant 0 : index
      %c0_16 = arith.constant 0 : index
      %42 = vector.load %arg6[%c0_15, %c0_16] : memref<8x128xf32, #tpu.memory_space<vmem>>, vector<8x128xf32>
      tpu.vector_store %arg6[%c0_15, %c0_16], %41 {strides = array<i32>} : memref<8x128xf32, #tpu.memory_space<vmem>>, vector<8x128xf32>,
    } else {
    }
    %c0 = arith.constant 0 : index
    %c0_1 = arith.constant 0 : index
    %3 = vector.load %arg2[%c0, %c0_1] : memref<32x128xf32, #tpu.memory_space<vmem>>, vector<32x128xf32>
    %c0_2 = arith.constant 0 : index
    %c0_3 = arith.constant 0 : index
    %4 = vector.load %arg3[%c0_2, %c0_3] : memref<32x128xbf16, #tpu.memory_space<vmem>>, vector<32x128xbf16>
    %5 = arith.extf %4 : vector<32x128xbf16> to vector<32x128xf32>
    %6 = math.absf %3 : vector<32x128xf32>
    %cst = arith.constant 0.000000e+00 : f32
    %7 = vector.broadcast %cst : f32 to vector<32x128xf32>
    %8 = arith.subf %7, %6 : vector<32x128xf32>
    %9 = math.exp %8 : vector<32x128xf32>
    %cst_4 = arith.constant 1.000000e+00 : f32
    %10 = vector.broadcast %cst_4 : f32 to vector<32x128xf32>
    %11 = arith.addf %10, %9 : vector<32x128xf32>
    %cst_5 = arith.constant 0.000000e+00 : f32
    %12 = vector.broadcast %cst_5 : f32 to vector<32x128xf32>
    %13 = arith.maximumf %3, %12 : vector<32x128xf32>
    %14 = arith.mulf %3, %5 : vector<32x128xf32>
    %15 = arith.subf %13, %14 : vector<32x128xf32>
    %16 = math.log %11 : vector<32x128xf32>
    %17 = arith.addf %15, %16 : vector<32x128xf32>
    %18 = tpu.reciprocal %11 {approx = true} : vector<32x128xf32> -> vector<32x128xf32>
    %cst_6 = arith.constant 0.000000e+00 : f32
    %19 = vector.broadcast %cst_6 : f32 to vector<32x128xf32>
    %20 = arith.cmpf oge, %3, %19 : vector<32x128xf32>
    %21 = arith.mulf %9, %18 : vector<32x128xf32>
    %22 = arith.select %20, %18, %21 : vector<32x128xi1>, vector<32x128xf32>
    %23 = arith.addf %5, %22 : vector<32x128xf32>
    %24 = arith.mulf %22, %5 : vector<32x128xf32>
    %cst_7 = arith.constant 2.000000e+00 : f32
    %25 = vector.broadcast %cst_7 : f32 to vector<32x128xf32>
    %26 = arith.mulf %25, %24 : vector<32x128xf32>
    %27 = arith.subf %23, %26 : vector<32x128xf32>
    %28 = arith.mulf %27, %27 : vector<32x128xf32>
    %29 = arith.mulf %28, %17 : vector<32x128xf32>
    %c1_i32 = arith.constant 1 : i32
    %30 = arith.muli %arg0, %c1_i32 : i32
    %31 = arith.addi %30, %arg1 : i32
    %c0_i32_8 = arith.constant 0 : i32
    %32 = arith.cmpi slt, %31, %c0_i32_8 : i32
    %33 = arith.extui %32 : i1 to i32
    %c0_i32_9 = arith.constant 0 : i32
    %34 = arith.cmpi ne, %33, %c0_i32_9 : i32
    scf.if %34 {
      %c0_14 = arith.constant 0 : index
      %c0_15 = arith.constant 0 : index
      %41 = vector.load %arg6[%c0_14, %c0_15] : memref<8x128xf32, #tpu.memory_space<vmem>>, vector<8x128xf32>
      %42 = vector.shape_cast %29 : vector<32x128xf32> to vector<4x8x128xf32>
      %cst_16 = arith.constant dense<0.000000e+00> : vector<8x128xf32>
      %43 = vector.multi_reduction <add>, %42, %cst_16 [0] : vector<4x8x128xf32> to vector<8x128xf32>
      %44 = arith.addf %41, %43 : vector<8x128xf32>
      %c0_17 = arith.constant 0 : index
      %c0_18 = arith.constant 0 : index
      %45 = vector.load %arg6[%c0_17, %c0_18] : memref<8x128xf32, #tpu.memory_space<vmem>>, vector<8x128xf32>
      tpu.vector_store %arg6[%c0_17, %c0_18], %44 {strides = array<i32>} : memref<8x128xf32, #tpu.memory_space<vmem>>, vector<8x128xf32>,
    } else {
    }
    %c0_i32_10 = arith.constant 0 : i32
    %35 = arith.cmpi sge, %31, %c0_i32_10 : i32
    %36 = arith.extui %35 : i1 to i32
    %c0_i32_11 = arith.constant 0 : i32
    %37 = arith.cmpi ne, %36, %c0_i32_11 : i32
    scf.if %37 {
      %c32_i32 = arith.constant 32 : i32
      %41 = arith.muli %31, %c32_i32 : i32
      %42 = tpu.iota {dimensions = array<i32: 0>} : vector<32x1xi32>
      %43 = vector.broadcast %41 : i32 to vector<32x1xi32>
      %44 = arith.addi %43, %42 : vector<32x1xi32>
      %c0_14 = arith.constant 0 : index
      %c0_15 = arith.constant 0 : index
      %45 = vector.load %arg6[%c0_14, %c0_15] : memref<8x128xf32, #tpu.memory_space<vmem>>, vector<8x128xf32>
      %c30_i32 = arith.constant 30 : i32
      %46 = vector.broadcast %c30_i32 : i32 to vector<32x1xi32>
      %47 = arith.cmpi slt, %44, %46 : vector<32x1xi32>
      %cst_16 = arith.constant 0.000000e+00 : f32
      %48 = vector.shape_cast %47 : vector<32x1xi1> to vector<32x1xi1>
      %49 = vector.broadcast %48 : vector<32x1xi1> to vector<32x128xi1>
      %50 = vector.broadcast %cst_16 : f32 to vector<32x128xf32>
      %51 = arith.select %49, %29, %50 : vector<32x128xi1>, vector<32x128xf32>
      %52 = vector.shape_cast %51 : vector<32x128xf32> to vector<4x8x128xf32>
      %cst_17 = arith.constant dense<0.000000e+00> : vector<8x128xf32>
      %53 = vector.multi_reduction <add>, %52, %cst_17 [0] : vector<4x8x128xf32> to vector<8x128xf32>
      %54 = arith.addf %45, %53 : vector<8x128xf32>
      %c0_18 = arith.constant 0 : index
      %c0_19 = arith.constant 0 : index
      %55 = vector.load %arg6[%c0_18, %c0_19] : memref<8x128xf32, #tpu.memory_space<vmem>>, vector<8x128xf32>
      tpu.vector_store %arg6[%c0_18, %c0_19], %54 {strides = array<i32>} : memref<8x128xf32, #tpu.memory_space<vmem>>, vector<8x128xf32>,
    } else {
    }
    %c0_i32_12 = arith.constant 0 : i32
    %38 = arith.cmpi eq, %arg1, %c0_i32_12 : i32
    %39 = arith.extui %38 : i1 to i32
    %c0_i32_13 = arith.constant 0 : i32
    %40 = arith.cmpi ne, %39, %c0_i32_13 : i32
    scf.if %40 {
      %c0_14 = arith.constant 0 : index
      %c0_15 = arith.constant 0 : index
      %41 = vector.load %arg6[%c0_14, %c0_15] : memref<8x128xf32, #tpu.memory_space<vmem>>, vector<8x128xf32>
      %c0_16 = arith.constant 0 : index
      %c0_17 = arith.constant 0 : index
      %42 = vector.load %arg4[%c0_16, %c0_17] : memref<1x128xf32, #tpu.memory_space<vmem>>, vector<1x128xf32>
      %43 = vector.broadcast %42 : vector<1x128xf32> to vector<8x128xf32>
      %44 = arith.mulf %41, %43 : vector<8x128xf32>
      %45 = vector.shape_cast %44 : vector<8x128xf32> to vector<1x8x128xf32>
      %cst_18 = arith.constant dense<0.000000e+00> : vector<1xf32>
      %46 = vector.multi_reduction <add>, %45, %cst_18 [1, 2] : vector<1x8x128xf32> to vector<1xf32>
      %47 = vector.shape_cast %46 : vector<1xf32> to vector<1x1x1xf32>
      %48 = vector.extract %47[0, 0, 0] : f32 from vector<1x1x1xf32>
      %cst_19 = arith.constant 3.47222231E-4 : f32
      %49 = arith.mulf %48, %cst_19 : f32
      %50 = vector.broadcast %49 : f32 to vector<8x128xf32>
      %c0_20 = arith.constant 0 : index
      %c0_21 = arith.constant 0 : index
      %51 = vector.load %arg5[%c0_20, %c0_21] : memref<8x128xf32, #tpu.memory_space<vmem>>, vector<8x128xf32>
      tpu.vector_store %arg5[%c0_20, %c0_21], %50 {strides = array<i32>} : memref<8x128xf32, #tpu.memory_space<vmem>>, vector<8x128xf32>,
    } else {
    }
    return
  }
  func.func @transform_0(%arg0: i32, %arg1: i32) -> (i32, i32) {
    %c1_i32 = arith.constant 1 : i32
    %0 = arith.muli %arg0, %c1_i32 : i32
    %1 = arith.addi %0, %arg1 : i32
    %c0_i32 = arith.constant 0 : i32
    %c0_i32_0 = arith.constant 0 : i32
    return %1, %c0_i32 : i32, i32
  }
  func.func @transform_1(%arg0: i32, %arg1: i32) -> (i32, i32) {
    %c1_i32 = arith.constant 1 : i32
    %0 = arith.muli %arg0, %c1_i32 : i32
    %1 = arith.addi %0, %arg1 : i32
    %c0_i32 = arith.constant 0 : i32
    %c0_i32_0 = arith.constant 0 : i32
    return %1, %c0_i32 : i32, i32
  }
  func.func @transform_2(%arg0: i32, %arg1: i32) -> (i32, i32) {
    %c0_i32 = arith.constant 0 : i32
    %c0_i32_0 = arith.constant 0 : i32
    %c0_i32_1 = arith.constant 0 : i32
    return %c0_i32, %c0_i32_0 : i32, i32
  }
  func.func @transform_3(%arg0: i32, %arg1: i32) -> (i32, i32) {
    %c0_i32 = arith.constant 0 : i32
    %c0_i32_0 = arith.constant 0 : i32
    return %arg0, %c0_i32 : i32, i32
  }
}

</mosaic_0001>

<llo_original>
// kernel: tpu_custom_call.1
$region0: #{tpu_custom_call.1}
  #allocation0 [shape = 'u32[]', space=smem, size = 0x4, offset = 0x4, fixed_abs, tag = 'smem constant byte address 0x4 - core index']
  #allocation1 [shape = 'u32[72,128]{1,0:T(1,128)}', space=vmem, size = 0x9000, scoped, tag = 'internal scratch']
  #allocation2 [shape = 'f32[8,128]{1,0:T(8,128)}', space=vmem, size = 0x1000, scoped, tag = 'scratch operand']
  %s0 = inlined_call_operand.hbm [shape: f32[32,128], index: 0, kind: input, shape index: {}]
  %s1 = inlined_call_operand.hbm [shape: bf16[32,128], index: 1, kind: input, shape index: {}]
  %s2 = inlined_call_operand.vmem [shape: f32[1,128], index: 2, kind: input, shape index: {}]
  %s3 = inlined_call_operand.hbm [shape: f32[8,128], index: 3, kind: output, shape index: {}]
  %s4 = sld [smem:[#allocation0]]
  $region46: #{tpu_custom_call.1} parent=0
    _
  %s6 = ssub.s32 1, %s4
  %s7 = scalar_select 0, %s6, %s4
  $region1: #{tpu_custom_call.1} parent=0
    #allocation3 [shape = 'u8[16384]{0}', space=vmem, size = 0x4000, scoped, tag = 'input window, operand 0, single buffered']
    #allocation4 [shape = 's32[1]{0}', space=sflag, size = 0x4, scoped, tag = 'scoped memory for tpu_custom_call.1']
    #allocation5 [shape = 's32[1]{0}', space=sflag, size = 0x4, scoped, tag = 'scoped memory for tpu_custom_call.1']
    #allocation6 [shape = 'u8[8192]{0}', space=vmem, size = 0x2000, scoped, tag = 'input window, operand 1, single buffered']
    #allocation7 [shape = 's32[1]{0}', space=sflag, size = 0x4, scoped, tag = 'scoped memory for tpu_custom_call.1']
    #allocation8 [shape = 'u8[4096]{0}', space=vmem, size = 0x1000, scoped, tag = 'output window, operand 0, single buffered']
    %8 = vsyncpa [#allocation4], 0
    %9 = vsyncpa [#allocation7], 0
    %10 = vsyncpa [#allocation5], 0
    // Predicated region
    $region2: #{tpu_custom_call.1} parent=1 // pred_check
      _
    $region3: #{tpu_custom_call.1} parent=1 // pred_check_branch
      %12 = sbr.rel (0) target = $region5
    $region4: #{tpu_custom_call.1} parent=1 // pred_region
      %s13 = sadd.s32 0, 0
      %s14 = smul.u32 4, %s13
      %16 = vsyncadd [#allocation4], 0
      %s17 = smul.addr %s14, 8
      %s18 = scalar_lea.hbm %s0, %s17
      %s19 = sshll.u32 %s18, 4
      %s20 = int_to_ptr.hbm [resolvable:$true] %s19
      %s21 = sshll.u32 [#allocation3], 4
      %s22 = int_to_ptr.vmem [resolvable:$true] %s21
      %27 = dma.hbm_to_vmem [thread:$0]  %s20, 512, %s22, [#allocation4], 128, 128, 8
    $region5: #{tpu_custom_call.1} parent=1 // pred_fallthru
      _
    // Predicated region
    $region6: #{tpu_custom_call.1} parent=1 // pred_check
      _
    $region7: #{tpu_custom_call.1} parent=1 // pred_check_branch
      %29 = sbr.rel (0) target = $region9
    $region8: #{tpu_custom_call.1} parent=1 // pred_region
      %s30 = sadd.s32 0, 0
      %s31 = smul.u32 4, %s30
      %33 = vsyncadd [#allocation7], 0
      %s34 = smul.addr %s31, 4
      %s35 = scalar_lea.hbm %s1, %s34
      %s36 = sshll.u32 %s35, 4
      %s37 = int_to_ptr.hbm [resolvable:$true] %s36
      %s38 = sshll.u32 [#allocation6], 4
      %s39 = int_to_ptr.vmem [resolvable:$true] %s38
      %44 = dma.hbm_to_vmem [thread:$0]  %s37, 256, %s39, [#allocation7], 64, 64, 4
    $region9: #{tpu_custom_call.1} parent=1 // pred_fallthru
      _
    // Predicated region
    $region10: #{tpu_custom_call.1} parent=1 // pred_check
      _
    $region11: #{tpu_custom_call.1} parent=1 // pred_check_branch
      %46 = sbr.rel (0) target = $region13
    $region12: #{tpu_custom_call.1} parent=1 // pred_region
      _
    $region13: #{tpu_custom_call.1} parent=1 // pred_fallthru
      _
    // Predicated region
    $region14: #{tpu_custom_call.1} parent=1 // pred_check
      _
    $region15: #{tpu_custom_call.1} parent=1 // pred_check_branch
      %48 = sbr.rel (0) target = $region17
    $region16: #{tpu_custom_call.1} parent=1 // pred_region
      %50 = dma.done [#allocation4], 512
    $region17: #{tpu_custom_call.1} parent=1 // pred_fallthru
      _
    // Predicated region
    $region18: #{tpu_custom_call.1} parent=1 // pred_check
      _
    $region19: #{tpu_custom_call.1} parent=1 // pred_check_branch
      %52 = sbr.rel (0) target = $region21
    $region20: #{tpu_custom_call.1} parent=1 // pred_region
      %54 = dma.done [#allocation7], 256
    $region21: #{tpu_custom_call.1} parent=1 // pred_fallthru
      _
    %s55 = sadd.s32 0, 0
    %s56 = smul.u32 4, %s55
    %s57 = sadd.s32 0, 0
    %s58 = smul.u32 4, %s57
    %p59 = scmp.eq.s32.totalorder 0, 0
    // Predicated region
    $region22: #{tpu_custom_call.1} parent=1 // pred_check
      %p60 = pneg %p59
    $region23: #{tpu_custom_call.1} parent=1 // pred_check_branch
      %62 = sbr.rel (%p60) target = $region25
    $region24: #{tpu_custom_call.1} parent=1 // pred_region
      %63 = vst [vmem:[#allocation2] sm:$0xff] 0.0
    $region25: #{tpu_custom_call.1} parent=1 // pred_fallthru
      _
    %v64 = vld [vmem:[#allocation3] sm:$0xff]
    %v65 = vld [vmem:[#allocation3 + $0x8] sm:$0xff]
    %v66 = vld [vmem:[#allocation3 + $0x10] sm:$0xff]
    %v67 = vld [vmem:[#allocation3 + $0x18] sm:$0xff]
    %v68 = vld [vmem:[#allocation6] sm:$0xf]
    %v69 = vld [vmem:[#allocation6 + $0x4] sm:$0xf]
    %v70 = vld [vmem:[#allocation6 + $0x8] sm:$0xf]
    %v71 = vld [vmem:[#allocation6 + $0xc] sm:$0xf]
    %v72 = vunpack.c.l.bf16 %v68
    %v73 = vunpack.c.l.bf16 %v69
    %v74 = vunpack.c.l.bf16 %v70
    %v75 = vunpack.c.l.bf16 %v71
    %v76 = vand.u32 2147483647, %v64
    %v77 = vand.u32 2147483647, %v65
    %v78 = vand.u32 2147483647, %v66
    %v79 = vand.u32 2147483647, %v67
    %v80 = vsub.f32 0.0, %v76
    %v81 = vsub.f32 0.0, %v77
    %v82 = vsub.f32 0.0, %v78
    %v83 = vsub.f32 0.0, %v79
    %v84 = vmul.f32 %v80, 1.442695
    %v85 = vpow.pop %v84
    %v86 = vmul.f32 %v81, 1.442695
    %v87 = vpow.pop %v86
    %v88 = vmul.f32 %v82, 1.442695
    %v89 = vpow.pop %v88
    %v90 = vmul.f32 %v83, 1.442695
    %v91 = vpow.pop %v90
    %v92 = vadd.f32 %v85, 1.0
    %v93 = vadd.f32 %v87, 1.0
    %v94 = vadd.f32 %v89, 1.0
    %v95 = vadd.f32 %v91, 1.0
    %v96 = vmax.f32 %v64, 0.0
    %v97 = vmax.f32 %v65, 0.0
    %v98 = vmax.f32 %v66, 0.0
    %v99 = vmax.f32 %v67, 0.0
    %v100 = vmul.f32 %v64, %v72
    %v101 = vmul.f32 %v65, %v73
    %v102 = vmul.f32 %v66, %v74
    %v103 = vmul.f32 %v67, %v75
    %v104 = vsub.f32 %v96, %v100
    %v105 = vsub.f32 %v97, %v101
    %v106 = vsub.f32 %v98, %v102
    %v107 = vsub.f32 %v99, %v103
    %v108 = vlog2.pop %v92
    %v109 = vmul.f32 %v108, 0.6931472
    %v110 = vlog2.pop %v93
    %v111 = vmul.f32 %v110, 0.6931472
    %v112 = vlog2.pop %v94
    %v113 = vmul.f32 %v112, 0.6931472
    %v114 = vlog2.pop %v95
    %v115 = vmul.f32 %v114, 0.6931472
    %v116 = vadd.f32 %v104, %v109
    %v117 = vadd.f32 %v105, %v111
    %v118 = vadd.f32 %v106, %v113
    %v119 = vadd.f32 %v107, %v115
    %v120 = vrcp.pop %v92
    %v121 = vrcp.pop %v93
    %v122 = vrcp.pop %v94
    %v123 = vrcp.pop %v95
    %vm124 = vcmp.ge.f32.partialorder %v64, 0.0
    %vm125 = vcmp.ge.f32.partialorder %v65, 0.0
    %vm126 = vcmp.ge.f32.partialorder %v66, 0.0
    %vm127 = vcmp.ge.f32.partialorder %v67, 0.0
    %v128 = vmul.f32 %v85, %v120
    %v129 = vmul.f32 %v87, %v121
    %v130 = vmul.f32 %v89, %v122
    %v131 = vmul.f32 %v91, %v123
    %v132 = vsel %vm124, %v120, %v128
    %v133 = vsel %vm125, %v121, %v129
    %v134 = vsel %vm126, %v122, %v130
    %v135 = vsel %vm127, %v123, %v131
    %v136 = vadd.f32 %v72, %v132
    %v137 = vadd.f32 %v73, %v133
    %v138 = vadd.f32 %v74, %v134
    %v139 = vadd.f32 %v75, %v135
    %v140 = vmul.f32 %v132, %v72
    %v141 = vmul.f32 %v133, %v73
    %v142 = vmul.f32 %v134, %v74
    %v143 = vmul.f32 %v135, %v75
    %v144 = vmul.f32 %v140, 2.0
    %v145 = vmul.f32 %v141, 2.0
    %v146 = vmul.f32 %v142, 2.0
    %v147 = vmul.f32 %v143, 2.0
    %v148 = vsub.f32 %v136, %v144
    %v149 = vsub.f32 %v137, %v145
    %v150 = vsub.f32 %v138, %v146
    %v151 = vsub.f32 %v139, %v147
    %v152 = vmul.f32 %v148, %v148
    %v153 = vmul.f32 %v149, %v149
    %v154 = vmul.f32 %v150, %v150
    %v155 = vmul.f32 %v151, %v151
    %v156 = vmul.f32 %v152, %v116
    %v157 = vmul.f32 %v153, %v117
    %v158 = vmul.f32 %v154, %v118
    %v159 = vmul.f32 %v155, %v119
    %s160 = sadd.s32 0, 0
    %p161 = scmp.lt.s32.totalorder %s160, 0
    // Predicated region
    $region26: #{tpu_custom_call.1} parent=1 // pred_check
      %p162 = pneg %p161
    $region27: #{tpu_custom_call.1} parent=1 // pred_check_branch
      %164 = sbr.rel (%p162) target = $region29
    $region28: #{tpu_custom_call.1} parent=1 // pred_region
      %v165 = vld [vmem:[#allocation2] sm:$0xff]
      %v166 = vadd.f32 %v156, %v157
      %v167 = vadd.f32 %v166, %v158
      %v168 = vadd.f32 %v167, %v159
      %v169 = vadd.f32 %v165, %v168
      %170 = vst [vmem:[#allocation2] sm:$0xff] %v169
    $region29: #{tpu_custom_call.1} parent=1 // pred_fallthru
      _
    %p171 = scmp.ge.s32.totalorder %s160, 0
    // Predicated region
    $region30: #{tpu_custom_call.1} parent=1 // pred_check
      %p172 = pneg %p171
    $region31: #{tpu_custom_call.1} parent=1 // pred_check_branch
      %174 = sbr.rel (%p172) target = $region33
    $region32: #{tpu_custom_call.1} parent=1 // pred_region
      %s175 = smul.u32 %s160, 32
      %v176 = vlaneseq
      %v177 = vshrl.u32 %v176, 7
      %v178 = vadd.s32 %v177, 8
      %v179 = vadd.s32 %v177, 16
      %v180 = vadd.s32 %v177, 24
      %v181 = vstv %s175
      %v182 = vadd.s32 %v181, %v177
      %v183 = vadd.s32 %v181, %v178
      %v184 = vadd.s32 %v181, %v179
      %v185 = vadd.s32 %v181, %v180
      %v186 = vld [vmem:[#allocation2] sm:$0xff]
      %vm187 = vcmp.lt.s32.totalorder %v182, 30
      %vm188 = vcmp.lt.s32.totalorder %v183, 30
      %vm189 = vcmp.lt.s32.totalorder %v184, 30
      %vm190 = vcmp.lt.s32.totalorder %v185, 30
      %v191 = vsel %vm187, 1, 0
      %v192 = vsel %vm188, 1, 0
      %v193 = vsel %vm189, 1, 0
      %v194 = vsel %vm190, 1, 0
      %vm195 = vcmp.eq.s32.totalorder %v191, 1
      %vm196 = vcmp.eq.s32.totalorder %v192, 1
      %vm197 = vcmp.eq.s32.totalorder %v193, 1
      %vm198 = vcmp.eq.s32.totalorder %v194, 1
      %v199 = vsel %vm195, %v156, 0.0
      %v200 = vsel %vm196, %v157, 0.0
      %v201 = vsel %vm197, %v158, 0.0
      %v202 = vsel %vm198, %v159, 0.0
      %v203 = vadd.f32 %v199, %v200
      %v204 = vadd.f32 %v203, %v201
      %v205 = vadd.f32 %v204, %v202
      %v206 = vadd.f32 %v186, %v205
      %207 = vst [vmem:[#allocation2] sm:$0xff] %v206
    $region33: #{tpu_custom_call.1} parent=1 // pred_fallthru
      _
    // Predicated region
    $region34: #{tpu_custom_call.1} parent=1 // pred_check
      %p208 = pneg %p59
    $region35: #{tpu_custom_call.1} parent=1 // pred_check_branch
      %210 = sbr.rel (%p208) target = $region37
    $region36: #{tpu_custom_call.1} parent=1 // pred_region
      %v211 = vld [vmem:[#allocation2] sm:$0xff]
      %v212 = vld [vmem:[%s2] sm:$0x1]
      %v214 = vperm.slane %v212, 0
      %v216 = vmul.f32 %v211, %v214
      %217 = vadd.xlane.f32.xlu0 %v216
      %v218 = vpop.xlane.xlu0 %217
      %v219 = vrot.slane %v218, 4
      %v220 = vadd.f32 %v218, %v219
      %v221 = vrot.slane %v220, 2
      %v222 = vadd.f32 %v220, %v221
      %v223 = vrot.slane %v222, 1
      %v224 = vadd.f32 %v222, %v223
      %s225 = vtos %v224
      %s226 = smul.f32 %s225, 0.00034722223
      %v227 = vstv %s226
      %228 = vst [vmem:[#allocation8] sm:$0xff] %v227
    $region37: #{tpu_custom_call.1} parent=1 // pred_fallthru
      _
    // Predicated region
    $region38: #{tpu_custom_call.1} parent=1 // pred_check
      _
    $region39: #{tpu_custom_call.1} parent=1 // pred_check_branch
      %230 = sbr.rel (0) target = $region41
    $region40: #{tpu_custom_call.1} parent=1 // pred_region
      %232 = vsyncadd [#allocation5], 0
      %s234 = sshll.u32 [#allocation8], 4
      %s235 = int_to_ptr.vmem [resolvable:$true] %s234
      %s236 = sshll.u32 %s3, 4
      %s237 = int_to_ptr.hbm [resolvable:$true] %s236
      %239 = dma.vmem_to_hbm [thread:$0]  %s235, 128, %s237, [#allocation5]
    $region41: #{tpu_custom_call.1} parent=1 // pred_fallthru
      _
    // Predicated region
    $region42: #{tpu_custom_call.1} parent=1 // pred_check
      _
    $region43: #{tpu_custom_call.1} parent=1 // pred_check_branch
      %241 = sbr.rel (0) target = $region45
    $region44: #{tpu_custom_call.1} parent=1 // pred_region
      %243 = dma.done [#allocation5], 128
    $region45: #{tpu_custom_call.1} parent=1 // pred_fallthru
      _
    %244 = vsyncpa [#allocation4], 1
    %245 = vsyncpa [#allocation7], 1
    %246 = vsyncpa [#allocation5], 1

</llo_original>
